<compile_context>
chip_gen: v7x
topology: tpu7x:2x2x1
jax: 0.10.0
libtpu: 0.0.40
codegen_flags: <defaults>
</compile_context>

<pallas_src>
from functools import partial

import jax
import jax.numpy as jnp
from jax.experimental import pallas as pl
from jax.experimental.pallas import tpu as pltpu


def _conv_kernel(x_ref, w_ref, b_ref, o_ref, *, offsets, tile_len):
    # x_ref: (1, 1, Cin, span)   bf16 halo slab (one batch elem, one spatial tile)
    # w_ref: (Cout, 9*Cin)       bf16 conv weight, K-order (ky, kx, ci)
    # b_ref: (Cout, 1)           f32 bias
    # o_ref: (1, Cout, tile_len) f32 output block (flattened, row-padded coords)
    xv = x_ref[0, 0]                                                  # (Cin, span)
    cols = jnp.concatenate(
        [xv[:, off:off + tile_len] for off in offsets], axis=0)      # (9*Cin, tile)
    acc = jnp.dot(w_ref[...], cols, preferred_element_type=jnp.float32)
    o_ref[0] = (acc + b_ref[...]).astype(o_ref.dtype)


def _pick_tile_len(flat, batch):
    """Largest 128-multiple divisor of `flat` that is <= ~4096 lanes.

    Falls back to the full extent when no such divisor exists (e.g. tiny test
    images).  For batch==1 we still try to split so both v7x TensorCores run.
    """
    target = 4096
    cands = [d for d in range(128, flat, 128) if flat % d == 0]
    if not cands or (flat <= target and batch > 1):
        return flat
    under = [d for d in cands if d <= target]
    return max(under) if under else min(cands)


@partial(jax.jit, static_argnames=("img_size",))
def output_proj(x_blc, weight_oihw, bias, img_size=(128, 128)):
    """Equivalent of OutputProj.forward (default: no act_layer, no norm).

    x_blc:       (B, L, C)  float32, L = H*W, C = in_channel
    weight_oihw: (Cout, C, 3, 3)
    bias:        (Cout,)
    returns:     (B, Cout, H, W) float32
    """
    B, L, Cin = x_blc.shape
    H, W = img_size
    assert L == H * W, "L must equal H*W"
    Hp, Wp = H + 2, W + 2
    Cout = weight_oihw.shape[0]
    K = 9 * Cin
    flat_out = H * Wp                 # per-(b, cout) output stream incl. 2 junk cols/row
    flat_in = Hp * Wp + 2             # padded stream + 1 guard element each end

    # ---- wrapper data movement (bf16 after the first cast) -----------------
    x_bf = x_blc.astype(jnp.bfloat16)
    x_img = jnp.transpose(x_bf, (0, 2, 1)).reshape(B, Cin, H, W)      # (B,C,H,W)
    x_pad = jnp.pad(x_img, ((0, 0), (0, 0), (1, 1), (1, 1)))          # (B,C,Hp,Wp)
    xg = jnp.pad(x_pad.reshape(B, Cin, Hp * Wp), ((0, 0), (0, 0), (1, 1)))
    assert xg.shape[-1] == flat_in

    tile_len = _pick_tile_len(flat_out, B)
    n_t = flat_out // tile_len
    assert n_t * tile_len == flat_out
    span = tile_len + 2 * Wp + 2      # tile + halo needed by the 3x3 taps

    # Row-tiled halo view: slab t = xg[:, :, t*tile_len : t*tile_len + span].
    # Overlap is only the halo (2*Wp+2 elems / tile) -> ~1.0-1.1x input bytes.
    slabs = jnp.stack(
        [xg[:, :, t * tile_len:t * tile_len + span] for t in range(n_t)], axis=1
    )                                                                 # (B, n_t, Cin, span)

    # (Cout, Cin, ky, kx) -> (Cout, ky, kx, Cin) -> (Cout, 9*Cin): matches the
    # in-kernel tap order (ky major, then kx, then ci).
    w_r = jnp.transpose(weight_oihw, (0, 2, 3, 1)).reshape(Cout, K).astype(jnp.bfloat16)
    b_r = bias.reshape(Cout, 1).astype(jnp.float32)

    # Output flat index j = h*Wp + w' reads padded input at j + ky*Wp + kx
    # (the +1 front guard in xg absorbs the kx-1 shift).
    offsets = tuple(ky * Wp + kx for ky in range(3) for kx in range(3))

    cost = pl.CostEstimate(
        flops=2 * B * flat_out * K * Cout,
        transcendentals=0,
        bytes_accessed=int(B * n_t * Cin * span * 2 + Cout * K * 2 + Cout * 4
                           + B * Cout * flat_out * 4),
    )

    out_flat = pl.pallas_call(
        partial(_conv_kernel, offsets=offsets, tile_len=tile_len),
        out_shape=jax.ShapeDtypeStruct((B, Cout, flat_out), jnp.float32),
        grid_spec=pltpu.PrefetchScalarGridSpec(
            num_scalar_prefetch=0,
            grid=(B, n_t),
            in_specs=[
                pl.BlockSpec((1, 1, Cin, span), lambda b, t: (b, t, 0, 0)),
                pl.BlockSpec((Cout, K), lambda b, t: (0, 0)),
                pl.BlockSpec((Cout, 1), lambda b, t: (0, 0)),
            ],
            out_specs=pl.BlockSpec((1, Cout, tile_len), lambda b, t: (b, 0, t)),
        ),
        compiler_params=pltpu.CompilerParams(
            dimension_semantics=("parallel", "parallel"),
        ),
        cost_estimate=cost,
    )(slabs, w_r, b_r)

    # Drop the 2 junk columns per row; return the PyTorch layout (B, Cout, H, W).
    return out_flat.reshape(B, Cout, H, Wp)[:, :, :, 1:W + 1]


def _reference(x_blc, weight_oihw, bias, img_size):
    B, L, C = x_blc.shape
    H, W = img_size
    x = jnp.transpose(x_blc, (0, 2, 1)).reshape(B, C, H, W)
    y = jax.lax.conv_general_dilated(
        x, weight_oihw, window_strides=(1, 1), padding="SAME",
        dimension_numbers=("NCHW", "OIHW", "NCHW"),
    )
    return y + bias[None, :, None, None]


if __name__ == "__main__":
    B, Cin, Cout, H, W = 2, 64, 3, 16, 16
    L = H * W

    key = jax.random.PRNGKey(0)
    k_x, k_w, k_b = jax.random.split(key, 3)
    x = jax.random.normal(k_x, (B, L, Cin), dtype=jnp.float32)
    weight = jax.random.normal(k_w, (Cout, Cin, 3, 3), dtype=jnp.float32) * 0.1
    bias = jax.random.normal(k_b, (Cout,), dtype=jnp.float32) * 0.1

    out = output_proj(x, weight, bias, img_size=(H, W))
    out = jax.block_until_ready(out)

    ref = _reference(x, weight, bias, (H, W))
    assert out.shape == (B, Cout, H, W)
    # bf16 MXU inputs with f32 accumulation -> small quantization error vs f32 ref.
    err = float(jnp.max(jnp.abs(out - ref)))
    assert jnp.allclose(out, ref, atol=5e-2, rtol=5e-2), err

    print("KERNEL_OK")
</pallas_src>

<mosaic_0001>
module attributes {stable_mosaic.version = 11 : i64} {
  func.func @_conv_kernel(%arg0: i32, %arg1: i32, %arg2: memref<1x1x64x326xbf16, #tpu.memory_space<vmem>>, %arg3: memref<3x576xbf16, #tpu.memory_space<vmem>>, %arg4: memref<3x1xf32, #tpu.memory_space<vmem>>, %arg5: memref<1x3x288xf32, #tpu.memory_space<vmem>>) attributes {dimension_semantics = [#tpu.dimension_semantics<parallel>, #tpu.dimension_semantics<parallel>], iteration_bounds = array<i64: 2, 1>, scalar_prefetch = 0 : i64, scratch_operands = 0 : i64, tpu.core_type = #tpu.core_type<tc>, window_params = [{transform_indices = @transform_0, window_bounds = array<i64: 1, 1, 64, 326>}, {pipeline_mode = #tpu.pipeline_mode<synchronous>, transform_indices = @transform_1, window_bounds = array<i64: 3, 576>}, {pipeline_mode = #tpu.pipeline_mode<synchronous>, transform_indices = @transform_2, window_bounds = array<i64: 3, 1>}, {transform_indices = @transform_3, window_bounds = array<i64: 1, 3, 288>}]} {
    %c0 = arith.constant 0 : index
    %c0_0 = arith.constant 0 : index
    %c0_1 = arith.constant 0 : index
    %c0_2 = arith.constant 0 : index
    %0 = vector.load %arg2[%c0, %c0_0, %c0_1, %c0_2] : memref<1x1x64x326xbf16, #tpu.memory_space<vmem>>, vector<1x1x64x326xbf16>
    %1 = vector.shape_cast %0 : vector<1x1x64x326xbf16> to vector<64x326xbf16>
    %2 = vector.extract_strided_slice %1 {offsets = [0, 0], sizes = [64, 288], strides = [1, 1]} : vector<64x326xbf16> to vector<64x288xbf16>
    %3 = vector.extract_strided_slice %1 {offsets = [0, 1], sizes = [64, 288], strides = [1, 1]} : vector<64x326xbf16> to vector<64x288xbf16>
    %4 = vector.extract_strided_slice %1 {offsets = [0, 2], sizes = [64, 288], strides = [1, 1]} : vector<64x326xbf16> to vector<64x288xbf16>
    %5 = vector.extract_strided_slice %1 {offsets = [0, 18], sizes = [64, 288], strides = [1, 1]} : vector<64x326xbf16> to vector<64x288xbf16>
    %6 = vector.extract_strided_slice %1 {offsets = [0, 19], sizes = [64, 288], strides = [1, 1]} : vector<64x326xbf16> to vector<64x288xbf16>
    %7 = vector.extract_strided_slice %1 {offsets = [0, 20], sizes = [64, 288], strides = [1, 1]} : vector<64x326xbf16> to vector<64x288xbf16>
    %8 = vector.extract_strided_slice %1 {offsets = [0, 36], sizes = [64, 288], strides = [1, 1]} : vector<64x326xbf16> to vector<64x288xbf16>
    %9 = vector.extract_strided_slice %1 {offsets = [0, 37], sizes = [64, 288], strides = [1, 1]} : vector<64x326xbf16> to vector<64x288xbf16>
    %10 = vector.extract_strided_slice %1 {offsets = [0, 38], sizes = [64, 288], strides = [1, 1]} : vector<64x326xbf16> to vector<64x288xbf16>
    %11 = tpu.concatenate %2, %3, %4, %5, %6, %7, %8, %9, %10 in 0 : vector<64x288xbf16>, vector<64x288xbf16>, vector<64x288xbf16>, vector<64x288xbf16>, vector<64x288xbf16>, vector<64x288xbf16>, vector<64x288xbf16>, vector<64x288xbf16>, vector<64x288xbf16> -> vector<576x288xbf16>
    %c0_3 = arith.constant 0 : index
    %c0_4 = arith.constant 0 : index
    %12 = vector.load %arg3[%c0_3, %c0_4] : memref<3x576xbf16, #tpu.memory_space<vmem>>, vector<3x576xbf16>
    %cst = arith.constant dense<0.000000e+00> : vector<3x288xf32>
    %13 = tpu.matmul %12, %11, %cst {dimension_numbers = #tpu.dot_dimension_numbers<[1], [0], [0], [1], [0, 0, 1, 1], [], []>} : vector<3x576xbf16>, vector<576x288xbf16>, vector<3x288xf32> -> vector<3x288xf32>
    %c0_5 = arith.constant 0 : index
    %c0_6 = arith.constant 0 : index
    %14 = vector.load %arg4[%c0_5, %c0_6] : memref<3x1xf32, #tpu.memory_space<vmem>>, vector<3x1xf32>
    %15 = vector.broadcast %14 : vector<3x1xf32> to vector<3x288xf32>
    %16 = arith.addf %13, %15 : vector<3x288xf32>
    %c0_7 = arith.constant 0 : index
    %c0_8 = arith.constant 0 : index
    %c0_9 = arith.constant 0 : index
    %17 = vector.load %arg5[%c0_7, %c0_8, %c0_9] : memref<1x3x288xf32, #tpu.memory_space<vmem>>, vector<1x3x288xf32>
    %18 = vector.shape_cast %17 : vector<1x3x288xf32> to vector<3x288xf32>
    %19 = vector.shape_cast %16 : vector<3x288xf32> to vector<1x3x288xf32>
    tpu.vector_store %arg5[%c0_7, %c0_8, %c0_9], %19 {strides = array<i32>} : memref<1x3x288xf32, #tpu.memory_space<vmem>>, vector<1x3x288xf32>,
    return
  }
  func.func @transform_0(%arg0: i32, %arg1: i32) -> (i32, i32, i32, i32) {
    %c0_i32 = arith.constant 0 : i32
    %c0_i32_0 = arith.constant 0 : i32
    %c0_i32_1 = arith.constant 0 : i32
    return %arg0, %arg1, %c0_i32, %c0_i32_0 : i32, i32, i32, i32
  }
  func.func @transform_1(%arg0: i32, %arg1: i32) -> (i32, i32) {
    %c0_i32 = arith.constant 0 : i32
    %c0_i32_0 = arith.constant 0 : i32
    %c0_i32_1 = arith.constant 0 : i32
    return %c0_i32, %c0_i32_0 : i32, i32
  }
  func.func @transform_2(%arg0: i32, %arg1: i32) -> (i32, i32) {
    %c0_i32 = arith.constant 0 : i32
    %c0_i32_0 = arith.constant 0 : i32
    %c0_i32_1 = arith.constant 0 : i32
    return %c0_i32, %c0_i32_0 : i32, i32
  }
  func.func @transform_3(%arg0: i32, %arg1: i32) -> (i32, i32, i32) {
    %c0_i32 = arith.constant 0 : i32
    %c0_i32_0 = arith.constant 0 : i32
    return %arg0, %c0_i32, %arg1 : i32, i32, i32
  }
}

</mosaic_0001>

<llo_original>
// kernel: output_proj.1
$region0: #{output_proj.1}
  #allocation0 [shape = 'u32[]', space=smem, size = 0x4, offset = 0x4, fixed_abs, tag = 'smem constant byte address 0x4 - core index']
  #allocation1 [shape = 'u32[144,128]{1,0:T(1,128)}', space=vmem, size = 0x12000, scoped, tag = 'internal scratch']
  %s0 = inlined_call_operand.vmem [shape: bf16[2,1,64,326], index: 0, kind: input, shape index: {}]
  %s1 = inlined_call_operand.vmem [shape: bf16[3,576], index: 1, kind: input, shape index: {}]
  %s2 = inlined_call_operand.vmem [shape: f32[3,1], index: 2, kind: input, shape index: {}]
  %s3 = inlined_call_operand.vmem [shape: f32[2,3,288], index: 3, kind: output, shape index: {}]
  %s4 = sld [smem:[#allocation0]]
  $region45: #{output_proj.1} parent=0
    _
  %s6 = ssub.s32 1, %s4
  %s7 = scalar_select 0, %s6, %s4
  loop: start=0, step=1, limit=4
  $region2: #{output_proj.1} parent=0 // loop_pre_header
    _
  $region3: #{output_proj.1} parent=0 // loop_header
    %s9 = sphi 0, %s13
    %p10 = scmp.ge.s32.totalorder %s9, 4
    %s16 = sphi 0, %s28
    %s17 = sphi 0, %s24
    %s18 = sphi 0, %s16
    %s19 = sphi 0, %s17
    %s20 = sphi 0, %s18
    %s21 = sphi 0, %s19
    %s33 = sphi 0, %s35
    %s36 = sphi 0, %s33
    %s37 = sphi 0, %s36
    %s53 = sphi 0, %s37
    %s57 = sphi 0, %s57
    %s59 = sphi 0, %s57
    %s60 = sphi 0, %s59
    %s74 = sphi 0, %s60
    %s78 = sphi 0, %s78
    %s80 = sphi 0, %s78
    %s81 = sphi 0, %s80
    %s95 = sphi 0, %s81
    %s103 = sphi 0, %s105
    %s106 = sphi 0, %s103
    %s107 = sphi 0, %s106
    %s123 = sphi 0, %s107
  $region4: #{output_proj.1} parent=0 // loop_header_branch
    %12 = sbr.rel (%p10) target = $region8
  $region5: #{output_proj.1} parent=0 // loop_body
    %s14 = ssub.s32 %s9, 1
    %s15 = ssub.s32 %s9, 2
    %s22 = sadd.s32 1, %s17
    %p23 = scmp.ge.s32.totalorder %s22, 1
    %s24 = scalar_select %p23, 0, %s22
    %s25 = sadd.s32 1, %s16
    %s26 = scalar_select %p23, %s25, %s16
    %p27 = scmp.ge.s32.totalorder %s26, 2
    %s28 = scalar_select %p27, 0, %s26
    %s29 = ssub.s32 %s16, %s28
    %s30 = ssub.s32 %s17, %s24
    %s31 = sor.u32 %s29, %s30
    %p32 = scmp.eq.s32.totalorder %s31, 0
    %s34 = sadd.s32 %s33, 1
    %s35 = scalar_select %p32, %s33, %s34
    %p38 = pneg %p32
    %p39 = scmp.eq.s32.totalorder %s9, 1
    %p40 = por %p38, %p39
    %p41 = scmp.ne.s32.totalorder %s33, %s36
    %p42 = scmp.eq.s32.totalorder %s9, 0
    %p43 = por %p41, %p42
    %p44 = scmp.ne.s32.totalorder %s33, %s36
    %p45 = scmp.eq.s32.totalorder %s14, 1
    %p46 = por %p44, %p45
    %p47 = scmp.ne.s32.totalorder %s36, %s37
    %p48 = scmp.eq.s32.totalorder %s14, 0
    %p49 = por %p47, %p48
    %p50 = scmp.ne.s32.totalorder %s36, %s37
    %p51 = scmp.eq.s32.totalorder %s15, 1
    %p52 = por %p50, %p51
    %p54 = scmp.ne.s32.totalorder %s37, %s53
    %p55 = scmp.eq.s32.totalorder %s15, 0
    %p56 = por %p54, %p55
    %s58 = sadd.s32 %s57, 1
    %p61 = scmp.eq.s32.totalorder %s9, 1
    %p62 = scmp.ne.s32.totalorder %s57, %s59
    %p63 = scmp.eq.s32.totalorder %s9, 0
    %p64 = por %p62, %p63
    %p65 = scmp.ne.s32.totalorder %s57, %s59
    %p66 = scmp.eq.s32.totalorder %s14, 1
    %p67 = por %p65, %p66
    %p68 = scmp.ne.s32.totalorder %s59, %s60
    %p69 = scmp.eq.s32.totalorder %s14, 0
    %p70 = por %p68, %p69
    %p71 = scmp.ne.s32.totalorder %s59, %s60
    %p72 = scmp.eq.s32.totalorder %s15, 1
    %p73 = por %p71, %p72
    %p75 = scmp.ne.s32.totalorder %s60, %s74
    %p76 = scmp.eq.s32.totalorder %s15, 0
    %p77 = por %p75, %p76
    %s79 = sadd.s32 %s78, 1
    %p82 = scmp.eq.s32.totalorder %s9, 1
    %p83 = scmp.ne.s32.totalorder %s78, %s80
    %p84 = scmp.eq.s32.totalorder %s9, 0
    %p85 = por %p83, %p84
    %p86 = scmp.ne.s32.totalorder %s78, %s80
    %p87 = scmp.eq.s32.totalorder %s14, 1
    %p88 = por %p86, %p87
    %p89 = scmp.ne.s32.totalorder %s80, %s81
    %p90 = scmp.eq.s32.totalorder %s14, 0
    %p91 = por %p89, %p90
    %p92 = scmp.ne.s32.totalorder %s80, %s81
    %p93 = scmp.eq.s32.totalorder %s15, 1
    %p94 = por %p92, %p93
    %p96 = scmp.ne.s32.totalorder %s81, %s95
    %p97 = scmp.eq.s32.totalorder %s15, 0
    %p98 = por %p96, %p97
    %s99 = ssub.s32 %s16, %s28
    %s100 = ssub.s32 %s17, %s24
    %s101 = sor.u32 %s99, %s100
    %p102 = scmp.eq.s32.totalorder %s101, 0
    %s104 = sadd.s32 %s103, 1
    %s105 = scalar_select %p102, %s103, %s104
    %p108 = pneg %p102
    %p109 = scmp.eq.s32.totalorder %s9, 1
    %p110 = por %p108, %p109
    %p111 = scmp.ne.s32.totalorder %s103, %s106
    %p112 = scmp.eq.s32.totalorder %s9, 0
    %p113 = por %p111, %p112
    %p114 = scmp.ne.s32.totalorder %s103, %s106
    %p115 = scmp.eq.s32.totalorder %s14, 1
    %p116 = por %p114, %p115
    %p117 = scmp.ne.s32.totalorder %s106, %s107
    %p118 = scmp.eq.s32.totalorder %s14, 0
    %p119 = por %p117, %p118
    %p120 = scmp.ne.s32.totalorder %s106, %s107
    %p121 = scmp.eq.s32.totalorder %s15, 1
    %p122 = por %p120, %p121
    %p124 = scmp.ne.s32.totalorder %s107, %s123
    %p125 = scmp.eq.s32.totalorder %s15, 0
    %p126 = por %p124, %p125
    %p127 = scmp.le.s32.totalorder 1, %s9
    %p128 = scmp.lt.s32.totalorder %s9, 3
    %p129 = pnand %p127, %p128
    %p130 = pneg %p129
    // Predicated region
    $region9: #{output_proj.1} parent=5 // pred_check
      _
    $region10: #{output_proj.1} parent=5 // pred_check_branch
      %132 = sbr.rel (%p129) target = $region12
    $region11: #{output_proj.1} parent=5 // pred_region
      %s133 = ssub.s32 %s9, 1
      // Predicated region
      $region13: #{output_proj.1} parent=11 // pred_check
        %p134 = pneg %p70
      $region14: #{output_proj.1} parent=11 // pred_check_branch
        %136 = sbr.rel (%p134) target = $region16
      $region15: #{output_proj.1} parent=11 // pred_region
        _
      $region16: #{output_proj.1} parent=11 // pred_fallthru
        _
      // Predicated region
      $region17: #{output_proj.1} parent=11 // pred_check
        %p137 = pneg %p91
      $region18: #{output_proj.1} parent=11 // pred_check_branch
        %139 = sbr.rel (%p137) target = $region20
      $region19: #{output_proj.1} parent=11 // pred_region
        _
      $region20: #{output_proj.1} parent=11 // pred_fallthru
        _
    $region12: #{output_proj.1} parent=5 // pred_fallthru
      _
    %p140 = scmp.lt.s32.totalorder %s9, 2
    // Predicated region
    $region21: #{output_proj.1} parent=5 // pred_check
      %p141 = pneg %p140
    $region22: #{output_proj.1} parent=5 // pred_check_branch
      %143 = sbr.rel (%p141) target = $region24
    $region23: #{output_proj.1} parent=5 // pred_region
      // Predicated region
      $region25: #{output_proj.1} parent=23 // pred_check
        %p144 = pneg %p43
      $region26: #{output_proj.1} parent=23 // pred_check_branch
        %146 = sbr.rel (%p144) target = $region28
      $region27: #{output_proj.1} parent=23 // pred_region
        %p147 = scmp.lt.s32.totalorder %s16, 1
        %s148 = scalar_select %p147, %s16, 1
        %p149 = scmp.lt.s32.totalorder %s17, 0
        %s150 = scalar_select %p149, %s17, 0
        %s151 = smul.addr %s150, 24
        %s152 = smul.addr %s148, 24
        %s153 = sadd.s32 %s151, %s152
        %s154 = smul.addr %s153, 4
        %s155 = scalar_lea.vmem %s0, %s154
      $region28: #{output_proj.1} parent=23 // pred_fallthru
        _
    $region24: #{output_proj.1} parent=5 // pred_fallthru
      _
    %p156 = scmp.le.s32.totalorder 1, %s9
    %p157 = scmp.lt.s32.totalorder %s9, 3
    %p158 = pnand %p156, %p157
    %p159 = pneg %p158
    // Predicated region
    $region29: #{output_proj.1} parent=5 // pred_check
      _
    $region30: #{output_proj.1} parent=5 // pred_check_branch
      %161 = sbr.rel (%p158) target = $region32
    $region31: #{output_proj.1} parent=5 // pred_region
      %s162 = ssub.s32 %s9, 1
      %p163 = scmp.lt.s32.totalorder %s18, 1
      %s164 = scalar_select %p163, %s18, 1
      %p165 = scmp.lt.s32.totalorder %s19, 0
      %s166 = scalar_select %p165, %s19, 0
      %s167 = smul.addr %s166, 24
      %s168 = smul.addr %s164, 24
      %s169 = sadd.s32 %s167, %s168
      %s170 = smul.addr %s169, 4
      %s171 = scalar_lea.vmem %s0, %s170
      %p172 = pneg %p49
      %p173 = pneg %p46
      %p174 = pneg %p70
      %p175 = pneg %p67
      %p176 = pneg %p91
      %p177 = pneg %p88
      %p178 = pneg %p119
      %p179 = pneg %p116
      %s180 = smul.u32 3, %s19
      %p181 = scmp.lt.s32.totalorder %s18, 1
      %s182 = scalar_select %p181, %s18, 1
      %p183 = scmp.lt.s32.totalorder %s180, 2
      %s184 = scalar_select %p183, %s180, 2
      %s185 = smul.addr %s182, 3
      %s186 = sadd.s32 %s184, %s185
      %s187 = smul.addr %s186, 4
      %s188 = scalar_lea.vmem %s3, %s187
      %p189 = scmp.lt.s32.totalorder %s18, 1
      %s190 = scalar_select %p189, %s18, 1
      %p191 = scmp.lt.s32.totalorder %s19, 0
      %s192 = scalar_select %p191, %s19, 0
      %s193 = smul.addr %s192, 24
      %s194 = smul.addr %s190, 24
      %s195 = sadd.s32 %s193, %s194
      %s196 = smul.addr %s195, 4
      %s197 = scalar_lea.vmem %s0, %s196
      %s198 = smul.u32 3, %s19
      %p199 = scmp.lt.s32.totalorder %s18, 1
      %s200 = scalar_select %p199, %s18, 1
      %p201 = scmp.lt.s32.totalorder %s198, 2
      %s202 = scalar_select %p201, %s198, 2
      %s203 = smul.addr %s200, 3
      %s204 = sadd.s32 %s202, %s203
      %s205 = smul.addr %s204, 4
      %s206 = scalar_lea.vmem %s3, %s205
      %s207 = smul.u32 3, %s19
      %v209 = vld [vmem:[%s197] sm:$0xff]
      %v210 = vld [vmem:[%s197 + $0x8] sm:$0xf]
      %v211 = vld [vmem:[%s197 + $0xc] sm:$0xff]
      %v212 = vld [vmem:[%s197 + $0x14] sm:$0xf]
      %v213 = vld [vmem:[%s197 + $0x18] sm:$0xff]
      %v214 = vld [vmem:[%s197 + $0x20] sm:$0xf]
      %v215 = vld [vmem:[%s197 + $0x24] sm:$0xff]
      %v216 = vld [vmem:[%s197 + $0x2c] sm:$0xf]
      %v217 = vld [vmem:[%s197 + $0x30] sm:$0xff]
      %v218 = vld [vmem:[%s197 + $0x38] sm:$0xf]
      %v219 = vld [vmem:[%s197 + $0x3c] sm:$0xff]
      %v220 = vld [vmem:[%s197 + $0x44] sm:$0xf]
      %v221 = vld [vmem:[%s197 + $0x48] sm:$0xff]
      %v222 = vld [vmem:[%s197 + $0x50] sm:$0xf]
      %v223 = vld [vmem:[%s197 + $0x54] sm:$0xff]
      %v224 = vld [vmem:[%s197 + $0x5c] sm:$0xf]
      %v241 = vunpack.c.l.b16 %v209
      %v242 = vunpack.c.h.b16 %v209
      %v243 = vunpack.c.l.b16 %v210
      %v244 = vunpack.c.l.b16 %v211
      %v245 = vunpack.c.h.b16 %v211
      %v246 = vunpack.c.l.b16 %v212
      %v247 = vunpack.c.l.b16 %v213
      %v248 = vunpack.c.h.b16 %v213
      %v249 = vunpack.c.l.b16 %v214
      %v250 = vunpack.c.l.b16 %v215
      %v251 = vunpack.c.h.b16 %v215
      %v252 = vunpack.c.l.b16 %v216
      %v253 = vunpack.c.l.b16 %v217
      %v254 = vunpack.c.h.b16 %v217
      %v255 = vunpack.c.l.b16 %v218
      %v256 = vunpack.c.l.b16 %v219
      %v257 = vunpack.c.h.b16 %v219
      %v258 = vunpack.c.l.b16 %v220
      %v259 = vunpack.c.l.b16 %v221
      %v260 = vunpack.c.h.b16 %v221
      %v261 = vunpack.c.l.b16 %v222
      %v262 = vunpack.c.l.b16 %v223
      %v263 = vunpack.c.h.b16 %v223
      %v264 = vunpack.c.l.b16 %v224
      %v265 = vpack.c.b16 %v244, %v241
      %v266 = vpack.c.b16 %v245, %v242
      %v267 = vpack.c.b16 %v246, %v243
      %v268 = vpack.c.b16 %v250, %v247
      %v269 = vpack.c.b16 %v251, %v248
      %v270 = vpack.c.b16 %v252, %v249
      %v271 = vpack.c.b16 %v256, %v253
      %v272 = vpack.c.b16 %v257, %v254
      %v273 = vpack.c.b16 %v258, %v255
      %v274 = vpack.c.b16 %v262, %v259
      %v275 = vpack.c.b16 %v263, %v260
      %v276 = vpack.c.b16 %v264, %v261
      %289 = vrot.lane.b32.xlu0 %v265, 127
      %v290 = vpop.permute.xlu0 %289
      %291 = vrot.lane.b32.xlu0 %v266, 127
      %v292 = vpop.permute.xlu0 %291
      %293 = vrot.lane.b32.xlu0 %v267, 127
      %v294 = vpop.permute.xlu0 %293
      %295 = vrot.lane.b32.xlu0 %v268, 127
      %v296 = vpop.permute.xlu0 %295
      %297 = vrot.lane.b32.xlu0 %v269, 127
      %v298 = vpop.permute.xlu0 %297
      %299 = vrot.lane.b32.xlu0 %v270, 127
      %v300 = vpop.permute.xlu0 %299
      %301 = vrot.lane.b32.xlu0 %v271, 127
      %v302 = vpop.permute.xlu0 %301
      %303 = vrot.lane.b32.xlu0 %v272, 127
      %v304 = vpop.permute.xlu0 %303
      %305 = vrot.lane.b32.xlu0 %v273, 127
      %v306 = vpop.permute.xlu0 %305
      %307 = vrot.lane.b32.xlu0 %v274, 127
      %v308 = vpop.permute.xlu0 %307
      %309 = vrot.lane.b32.xlu0 %v275, 127
      %v310 = vpop.permute.xlu0 %309
      %311 = vrot.lane.b32.xlu0 %v276, 127
      %v312 = vpop.permute.xlu0 %311
      %vm313 = vcmask 1039360
      %v314 = vsel %vm313, %v290, %v292
      %v315 = vsel %vm313, %v292, %v294
      %v316 = vsel %vm313, %v296, %v298
      %v317 = vsel %vm313, %v298, %v300
      %v318 = vsel %vm313, %v302, %v304
      %v319 = vsel %vm313, %v304, %v306
      %v320 = vsel %vm313, %v308, %v310
      %v321 = vsel %vm313, %v310, %v312
      %334 = vrot.lane.b32.xlu0 %v265, 126
      %v335 = vpop.permute.xlu0 %334
      %336 = vrot.lane.b32.xlu0 %v266, 126
      %v337 = vpop.permute.xlu0 %336
      %338 = vrot.lane.b32.xlu0 %v267, 126
      %v339 = vpop.permute.xlu0 %338
      %340 = vrot.lane.b32.xlu0 %v268, 126
      %v341 = vpop.permute.xlu0 %340
      %342 = vrot.lane.b32.xlu0 %v269, 126
      %v343 = vpop.permute.xlu0 %342
      %344 = vrot.lane.b32.xlu0 %v270, 126
      %v345 = vpop.permute.xlu0 %344
      %346 = vrot.lane.b32.xlu0 %v271, 126
      %v347 = vpop.permute.xlu0 %346
      %348 = vrot.lane.b32.xlu0 %v272, 126
      %v349 = vpop.permute.xlu0 %348
      %350 = vrot.lane.b32.xlu0 %v273, 126
      %v351 = vpop.permute.xlu0 %350
      %352 = vrot.lane.b32.xlu0 %v274, 126
      %v353 = vpop.permute.xlu0 %352
      %354 = vrot.lane.b32.xlu0 %v275, 126
      %v355 = vpop.permute.xlu0 %354
      %356 = vrot.lane.b32.xlu0 %v276, 126
      %v357 = vpop.permute.xlu0 %356
      %vm358 = vcmask 1031168
      %v359 = vsel %vm358, %v335, %v337
      %v360 = vsel %vm358, %v337, %v339
      %v361 = vsel %vm358, %v341, %v343
      %v362 = vsel %vm358, %v343, %v345
      %v363 = vsel %vm358, %v347, %v349
      %v364 = vsel %vm358, %v349, %v351
      %v365 = vsel %vm358, %v353, %v355
      %v366 = vsel %vm358, %v355, %v357
      %379 = vrot.lane.b32.xlu0 %v265, 110
      %v380 = vpop.permute.xlu0 %379
      %381 = vrot.lane.b32.xlu0 %v266, 110
      %v382 = vpop.permute.xlu0 %381
      %383 = vrot.lane.b32.xlu0 %v267, 110
      %v384 = vpop.permute.xlu0 %383
      %385 = vrot.lane.b32.xlu0 %v268, 110
      %v386 = vpop.permute.xlu0 %385
      %387 = vrot.lane.b32.xlu0 %v269, 110
      %v388 = vpop.permute.xlu0 %387
      %389 = vrot.lane.b32.xlu0 %v270, 110
      %v390 = vpop.permute.xlu0 %389
      %391 = vrot.lane.b32.xlu0 %v271, 110
      %v392 = vpop.permute.xlu0 %391
      %393 = vrot.lane.b32.xlu0 %v272, 110
      %v394 = vpop.permute.xlu0 %393
      %395 = vrot.lane.b32.xlu0 %v273, 110
      %v396 = vpop.permute.xlu0 %395
      %397 = vrot.lane.b32.xlu0 %v274, 110
      %v398 = vpop.permute.xlu0 %397
      %399 = vrot.lane.b32.xlu0 %v275, 110
      %v400 = vpop.permute.xlu0 %399
      %401 = vrot.lane.b32.xlu0 %v276, 110
      %v402 = vpop.permute.xlu0 %401
      %vm403 = vcmask 900096
      %v404 = vsel %vm403, %v380, %v382
      %v405 = vsel %vm403, %v382, %v384
      %v406 = vsel %vm403, %v386, %v388
      %v407 = vsel %vm403, %v388, %v390
      %v408 = vsel %vm403, %v392, %v394
      %v409 = vsel %vm403, %v394, %v396
      %v410 = vsel %vm403, %v398, %v400
      %v411 = vsel %vm403, %v400, %v402
      %424 = vrot.lane.b32.xlu0 %v265, 109
      %v425 = vpop.permute.xlu0 %424
      %426 = vrot.lane.b32.xlu0 %v266, 109
      %v427 = vpop.permute.xlu0 %426
      %428 = vrot.lane.b32.xlu0 %v267, 109
      %v429 = vpop.permute.xlu0 %428
      %430 = vrot.lane.b32.xlu0 %v268, 109
      %v431 = vpop.permute.xlu0 %430
      %432 = vrot.lane.b32.xlu0 %v269, 109
      %v433 = vpop.permute.xlu0 %432
      %434 = vrot.lane.b32.xlu0 %v270, 109
      %v435 = vpop.permute.xlu0 %434
      %436 = vrot.lane.b32.xlu0 %v271, 109
      %v437 = vpop.permute.xlu0 %436
      %438 = vrot.lane.b32.xlu0 %v272, 109
      %v439 = vpop.permute.xlu0 %438
      %440 = vrot.lane.b32.xlu0 %v273, 109
      %v441 = vpop.permute.xlu0 %440
      %442 = vrot.lane.b32.xlu0 %v274, 109
      %v443 = vpop.permute.xlu0 %442
      %444 = vrot.lane.b32.xlu0 %v275, 109
      %v445 = vpop.permute.xlu0 %444
      %446 = vrot.lane.b32.xlu0 %v276, 109
      %v447 = vpop.permute.xlu0 %446
      %vm448 = vcmask 891904
      %v449 = vsel %vm448, %v425, %v427
      %v450 = vsel %vm448, %v427, %v429
      %v451 = vsel %vm448, %v431, %v433
      %v452 = vsel %vm448, %v433, %v435
      %v453 = vsel %vm448, %v437, %v439
      %v454 = vsel %vm448, %v439, %v441
      %v455 = vsel %vm448, %v443, %v445
      %v456 = vsel %vm448, %v445, %v447
      %469 = vrot.lane.b32.xlu0 %v265, 108
      %v470 = vpop.permute.xlu0 %469
      %471 = vrot.lane.b32.xlu0 %v266, 108
      %v472 = vpop.permute.xlu0 %471
      %473 = vrot.lane.b32.xlu0 %v267, 108
      %v474 = vpop.permute.xlu0 %473
      %475 = vrot.lane.b32.xlu0 %v268, 108
      %v476 = vpop.permute.xlu0 %475
      %477 = vrot.lane.b32.xlu0 %v269, 108
      %v478 = vpop.permute.xlu0 %477
      %479 = vrot.lane.b32.xlu0 %v270, 108
      %v480 = vpop.permute.xlu0 %479
      %481 = vrot.lane.b32.xlu0 %v271, 108
      %v482 = vpop.permute.xlu0 %481
      %483 = vrot.lane.b32.xlu0 %v272, 108
      %v484 = vpop.permute.xlu0 %483
      %485 = vrot.lane.b32.xlu0 %v273, 108
      %v486 = vpop.permute.xlu0 %485
      %487 = vrot.lane.b32.xlu0 %v274, 108
      %v488 = vpop.permute.xlu0 %487
      %489 = vrot.lane.b32.xlu0 %v275, 108
      %v490 = vpop.permute.xlu0 %489
      %491 = vrot.lane.b32.xlu0 %v276, 108
      %v492 = vpop.permute.xlu0 %491
      %vm493 = vcmask 883712
      %v494 = vsel %vm493, %v470, %v472
      %v495 = vsel %vm493, %v472, %v474
      %v496 = vsel %vm493, %v476, %v478
      %v497 = vsel %vm493, %v478, %v480
      %v498 = vsel %vm493, %v482, %v484
      %v499 = vsel %vm493, %v484, %v486
      %v500 = vsel %vm493, %v488, %v490
      %v501 = vsel %vm493, %v490, %v492
      %514 = vrot.lane.b32.xlu0 %v265, 92
      %v515 = vpop.permute.xlu0 %514
      %516 = vrot.lane.b32.xlu0 %v266, 92
      %v517 = vpop.permute.xlu0 %516
      %518 = vrot.lane.b32.xlu0 %v267, 92
      %v519 = vpop.permute.xlu0 %518
      %520 = vrot.lane.b32.xlu0 %v268, 92
      %v521 = vpop.permute.xlu0 %520
      %522 = vrot.lane.b32.xlu0 %v269, 92
      %v523 = vpop.permute.xlu0 %522
      %524 = vrot.lane.b32.xlu0 %v270, 92
      %v525 = vpop.permute.xlu0 %524
      %526 = vrot.lane.b32.xlu0 %v271, 92
      %v527 = vpop.permute.xlu0 %526
      %528 = vrot.lane.b32.xlu0 %v272, 92
      %v529 = vpop.permute.xlu0 %528
      %530 = vrot.lane.b32.xlu0 %v273, 92
      %v531 = vpop.permute.xlu0 %530
      %532 = vrot.lane.b32.xlu0 %v274, 92
      %v533 = vpop.permute.xlu0 %532
      %534 = vrot.lane.b32.xlu0 %v275, 92
      %v535 = vpop.permute.xlu0 %534
      %536 = vrot.lane.b32.xlu0 %v276, 92
      %v537 = vpop.permute.xlu0 %536
      %vm538 = vcmask 752640
      %v539 = vsel %vm538, %v515, %v517
      %v540 = vsel %vm538, %v517, %v519
      %v541 = vsel %vm538, %v521, %v523
      %v542 = vsel %vm538, %v523, %v525
      %v543 = vsel %vm538, %v527, %v529
      %v544 = vsel %vm538, %v529, %v531
      %v545 = vsel %vm538, %v533, %v535
      %v546 = vsel %vm538, %v535, %v537
      %559 = vrot.lane.b32.xlu0 %v265, 91
      %v560 = vpop.permute.xlu0 %559
      %561 = vrot.lane.b32.xlu0 %v266, 91
      %v562 = vpop.permute.xlu0 %561
      %563 = vrot.lane.b32.xlu0 %v267, 91
      %v564 = vpop.permute.xlu0 %563
      %565 = vrot.lane.b32.xlu0 %v268, 91
      %v566 = vpop.permute.xlu0 %565
      %567 = vrot.lane.b32.xlu0 %v269, 91
      %v568 = vpop.permute.xlu0 %567
      %569 = vrot.lane.b32.xlu0 %v270, 91
      %v570 = vpop.permute.xlu0 %569
      %571 = vrot.lane.b32.xlu0 %v271, 91
      %v572 = vpop.permute.xlu0 %571
      %573 = vrot.lane.b32.xlu0 %v272, 91
      %v574 = vpop.permute.xlu0 %573
      %575 = vrot.lane.b32.xlu0 %v273, 91
      %v576 = vpop.permute.xlu0 %575
      %577 = vrot.lane.b32.xlu0 %v274, 91
      %v578 = vpop.permute.xlu0 %577
      %579 = vrot.lane.b32.xlu0 %v275, 91
      %v580 = vpop.permute.xlu0 %579
      %581 = vrot.lane.b32.xlu0 %v276, 91
      %v582 = vpop.permute.xlu0 %581
      %vm583 = vcmask 744448
      %v584 = vsel %vm583, %v560, %v562
      %v585 = vsel %vm583, %v562, %v564
      %v586 = vsel %vm583, %v566, %v568
      %v587 = vsel %vm583, %v568, %v570
      %v588 = vsel %vm583, %v572, %v574
      %v589 = vsel %vm583, %v574, %v576
      %v590 = vsel %vm583, %v578, %v580
      %v591 = vsel %vm583, %v580, %v582
      %604 = vrot.lane.b32.xlu0 %v265, 90
      %v605 = vpop.permute.xlu0 %604
      %606 = vrot.lane.b32.xlu0 %v266, 90
      %v607 = vpop.permute.xlu0 %606
      %608 = vrot.lane.b32.xlu0 %v267, 90
      %v609 = vpop.permute.xlu0 %608
      %610 = vrot.lane.b32.xlu0 %v268, 90
      %v611 = vpop.permute.xlu0 %610
      %612 = vrot.lane.b32.xlu0 %v269, 90
      %v613 = vpop.permute.xlu0 %612
      %614 = vrot.lane.b32.xlu0 %v270, 90
      %v615 = vpop.permute.xlu0 %614
      %616 = vrot.lane.b32.xlu0 %v271, 90
      %v617 = vpop.permute.xlu0 %616
      %618 = vrot.lane.b32.xlu0 %v272, 90
      %v619 = vpop.permute.xlu0 %618
      %620 = vrot.lane.b32.xlu0 %v273, 90
      %v621 = vpop.permute.xlu0 %620
      %622 = vrot.lane.b32.xlu0 %v274, 90
      %v623 = vpop.permute.xlu0 %622
      %624 = vrot.lane.b32.xlu0 %v275, 90
      %v625 = vpop.permute.xlu0 %624
      %626 = vrot.lane.b32.xlu0 %v276, 90
      %v627 = vpop.permute.xlu0 %626
      %vm628 = vcmask 736256
      %v629 = vsel %vm628, %v605, %v607
      %v630 = vsel %vm628, %v607, %v609
      %v631 = vsel %vm628, %v611, %v613
      %v632 = vsel %vm628, %v613, %v615
      %v633 = vsel %vm628, %v617, %v619
      %v634 = vsel %vm628, %v619, %v621
      %v635 = vsel %vm628, %v623, %v625
      %v636 = vsel %vm628, %v625, %v627
      %v649 = vld [vmem:[%s1] sm:$0xff]
      %v650 = vld [vmem:[%s1 + $0x8] sm:$0x3]
      %v651 = vld [vmem:[%s2] sm:$0x7]
      %653 = vset.pattern.permute.xlu0 0
      %654 = vperm.xlu0 %653, %v651
      %v655 = vpop.permute.xlu0 %654
      %v659 = vcombine.high %v649, %v649
      %v661 = vunpack.c.l.s4 1983009808
      %v662 = vunpack.c.0.s8 %v661
      %v663 = vlaneseq
      %v664 = vshrl.u32 %v663, 7
      %v665 = vsub.s32 %v662, %v664
      %v666 = vrot.slane %v649, %v665
      %v668 = vunpack.c.l.s4 1983009808
      %v669 = vunpack.c.0.s8 %v668
      %v670 = vlaneseq
      %v671 = vshrl.u32 %v670, 7
      %v672 = vsub.s32 %v669, %v671
      %v673 = vrot.slane %v659, %v672
      %v674 = vcombine.high %v666, %v666
      %v675 = vcombine.high %v673, %v673
      %v677 = vunpack.c.l.s4 1983009808
      %v678 = vunpack.c.0.s8 %v677
      %v679 = vlaneseq
      %v680 = vshrl.u32 %v679, 7
      %v681 = vsub.s32 %v678, %v680
      %v682 = vrot.slane %v650, %v681
      %vm687 = vcmask 523264
      %v689 = vsel %vm687, %v682, 0
      %691 = vmatprep.subr.bf16.mxu0 %v266
      %692 = vmatpush1.bf16.msra.mxu0 %v265
      %693 = vmatprep.subr.bf16.mxu0 %v269
      %694 = vmatpush1.bf16.msra.mxu0 %v268
      %695 = vmatprep.subr.bf16.mxu0 %v272
      %696 = vmatpush1.bf16.msra.mxu0 %v271
      %697 = vmatprep.subr.bf16.mxu0 %v275
      %698 = vmatpush1.bf16.msra.mxu0 %v274
      %699 = vmatprep.subr.bf16.mxu0 %v315
      %700 = vmatpush1.bf16.msra.mxu0 %v314
      %701 = vmatprep.subr.bf16.mxu0 %v317
      %702 = vmatpush1.bf16.msra.mxu0 %v316
      %703 = vmatprep.subr.bf16.mxu0 %v319
      %704 = vmatpush1.bf16.msra.mxu0 %v318
      %705 = vmatprep.subr.bf16.mxu0 %v321
      %706 = vmatpush1.bf16.msra.mxu0 %v320
      %707 = vmatprep.subr.bf16.mxu0 %v360
      %708 = vmatpush1.bf16.msra.mxu0 %v359
      %709 = vmatprep.subr.bf16.mxu0 %v362
      %710 = vmatpush1.bf16.msra.mxu0 %v361
      %711 = vmatprep.subr.bf16.mxu0 %v364
      %712 = vmatpush1.bf16.msra.mxu0 %v363
      %713 = vmatprep.subr.bf16.mxu0 %v366
      %714 = vmatpush1.bf16.msra.mxu0 %v365
      %715 = vmatprep.subr.bf16.mxu0 %v405
      %716 = vmatpush1.bf16.msra.mxu0 %v404
      %717 = vmatprep.subr.bf16.mxu0 %v407
      %718 = vmatpush1.bf16.msra.mxu0 %v406
      %719 = vmatprep.subr.bf16.mxu0 %v409
      %720 = vmatpush1.bf16.msra.mxu0 %v408
      %721 = vmatprep.subr.bf16.mxu0 %v411
      %722 = vmatpush1.bf16.msra.mxu0 %v410
      %723 = vmatprep.mubr.bf16.mxu0 %v674
      %724 = vmatmul.mubr.bf16.gmra.mrb[0].mxu0 %v666
      %v725 = vpop.f32.mrb[0].mxu0
      %v726 = vadd.f32 %v655, %v725
      %v727 = vpop.f32.mrb[0].mxu0
      %v728 = vadd.f32 %v655, %v727
      %v729 = vpop.f32.mrb[0].mxu0
      %v730 = vpop.f32.mrb[0].mxu0
      %731 = vdwg.mxu0
      %732 = vmatprep.subr.bf16.mxu0 %v450
      %733 = vmatpush1.bf16.msra.mxu0 %v449
      %734 = vmatprep.subr.bf16.mxu0 %v452
      %735 = vmatpush1.bf16.msra.mxu0 %v451
      %736 = vmatprep.subr.bf16.mxu0 %v454
      %737 = vmatpush1.bf16.msra.mxu0 %v453
      %738 = vmatprep.subr.bf16.mxu0 %v456
      %739 = vmatpush1.bf16.msra.mxu0 %v455
      %740 = vmatprep.subr.bf16.mxu0 %v495
      %741 = vmatpush1.bf16.msra.mxu0 %v494
      %742 = vmatprep.subr.bf16.mxu0 %v497
      %743 = vmatpush1.bf16.msra.mxu0 %v496
      %744 = vmatprep.subr.bf16.mxu0 %v499
      %745 = vmatpush1.bf16.msra.mxu0 %v498
      %746 = vmatprep.subr.bf16.mxu0 %v501
      %747 = vmatpush1.bf16.msra.mxu0 %v500
      %748 = vmatprep.subr.bf16.mxu0 %v540
      %749 = vmatpush1.bf16.msra.mxu0 %v539
      %750 = vmatprep.subr.bf16.mxu0 %v542
      %751 = vmatpush1.bf16.msra.mxu0 %v541
      %752 = vmatprep.subr.bf16.mxu0 %v544
      %753 = vmatpush1.bf16.msra.mxu0 %v543
      %754 = vmatprep.subr.bf16.mxu0 %v546
      %755 = vmatpush1.bf16.msra.mxu0 %v545
      %756 = vmatprep.subr.bf16.mxu0 %v585
      %757 = vmatpush1.bf16.msra.mxu0 %v584
      %758 = vmatprep.subr.bf16.mxu0 %v587
      %759 = vmatpush1.bf16.msra.mxu0 %v586
      %760 = vmatprep.subr.bf16.mxu0 %v589
      %761 = vmatpush1.bf16.msra.mxu0 %v588
      %762 = vmatprep.subr.bf16.mxu0 %v591
      %763 = vmatpush1.bf16.msra.mxu0 %v590
      %764 = vmatprep.mubr.bf16.mxu0 %v675
      %765 = vmatmul.mubr.bf16.gmra.mrb[0].mxu0 %v673
      %v766 = vpop.f32.mrb[0].mxu0
      %v767 = vadd.f32 %v726, %v766
      %v768 = vpop.f32.mrb[0].mxu0
      %v769 = vadd.f32 %v728, %v768
      %v770 = vpop.f32.mrb[0].mxu0
      %v771 = vpop.f32.mrb[0].mxu0
      %772 = vdwg.mxu0
      %773 = vmatprep.subr.bf16.mxu0 %v630
      %774 = vmatpush1.bf16.msra.mxu0 %v629
      %775 = vmatprep.subr.bf16.mxu0 %v632
      %776 = vmatpush1.bf16.msra.mxu0 %v631
      %777 = vmatprep.subr.bf16.mxu0 %v634
      %778 = vmatpush1.bf16.msra.mxu0 %v633
      %779 = vmatprep.subr.bf16.mxu0 %v636
      %780 = vmatpush1.bf16.msra.mxu0 %v635
      %781 = vmatprep.subr.bf16.mxu0 0
      %782 = vmatpush1.bf16.msra.mxu0 0
      %783 = vmatprep.subr.bf16.mxu0 0
      %784 = vmatpush1.bf16.msra.mxu0 0
      %785 = vmatprep.subr.bf16.mxu0 0
      %786 = vmatpush1.bf16.msra.mxu0 0
      %787 = vmatprep.subr.bf16.mxu0 0
      %788 = vmatpush1.bf16.msra.mxu0 0
      %789 = vmatprep.subr.bf16.mxu0 0
      %790 = vmatpush1.bf16.msra.mxu0 0
      %791 = vmatprep.subr.bf16.mxu0 0
      %792 = vmatpush1.bf16.msra.mxu0 0
      %793 = vmatprep.subr.bf16.mxu0 0
      %794 = vmatpush1.bf16.msra.mxu0 0
      %795 = vmatprep.subr.bf16.mxu0 0
      %796 = vmatpush1.bf16.msra.mxu0 0
      %797 = vmatprep.subr.bf16.mxu0 0
      %798 = vmatpush1.bf16.msra.mxu0 0
      %799 = vmatprep.subr.bf16.mxu0 0
      %800 = vmatpush1.bf16.msra.mxu0 0
      %801 = vmatprep.subr.bf16.mxu0 0
      %802 = vmatpush1.bf16.msra.mxu0 0
      %803 = vmatprep.subr.bf16.mxu0 0
      %804 = vmatpush1.bf16.msra.mxu0 0
      %805 = vmatprep.mubr.bf16.mxu0 0
      %806 = vmatmul.mubr.bf16.gmra.mrb[0].mxu0 %v689
      %v807 = vpop.f32.mrb[0].mxu0
      %v808 = vadd.f32 %v767, %v807
      %v809 = vpop.f32.mrb[0].mxu0
      %v810 = vadd.f32 %v769, %v809
      %v811 = vpop.f32.mrb[0].mxu0
      %v812 = vpop.f32.mrb[0].mxu0
      %813 = vdwg.mxu0
      %814 = vmatprep.subr.bf16.mxu0 0
      %815 = vmatpush1.bf16.msra.mxu0 %v267
      %816 = vmatprep.subr.bf16.mxu0 0
      %817 = vmatpush1.bf16.msra.mxu0 %v270
      %818 = vmatprep.subr.bf16.mxu0 0
      %819 = vmatpush1.bf16.msra.mxu0 %v273
      %820 = vmatprep.subr.bf16.mxu0 0
      %821 = vmatpush1.bf16.msra.mxu0 %v276
      %822 = vmatprep.subr.bf16.mxu0 0
      %823 = vmatpush1.bf16.msra.mxu0 %v294
      %824 = vmatprep.subr.bf16.mxu0 0
      %825 = vmatpush1.bf16.msra.mxu0 %v300
      %826 = vmatprep.subr.bf16.mxu0 0
      %827 = vmatpush1.bf16.msra.mxu0 %v306
      %828 = vmatprep.subr.bf16.mxu0 0
      %829 = vmatpush1.bf16.msra.mxu0 %v312
      %830 = vmatprep.subr.bf16.mxu0 0
      %831 = vmatpush1.bf16.msra.mxu0 %v339
      %832 = vmatprep.subr.bf16.mxu0 0
      %833 = vmatpush1.bf16.msra.mxu0 %v345
      %834 = vmatprep.subr.bf16.mxu0 0
      %835 = vmatpush1.bf16.msra.mxu0 %v351
      %836 = vmatprep.subr.bf16.mxu0 0
      %837 = vmatpush1.bf16.msra.mxu0 %v357
      %838 = vmatprep.subr.bf16.mxu0 0
      %839 = vmatpush1.bf16.msra.mxu0 %v384
      %840 = vmatprep.subr.bf16.mxu0 0
      %841 = vmatpush1.bf16.msra.mxu0 %v390
      %842 = vmatprep.subr.bf16.mxu0 0
      %843 = vmatpush1.bf16.msra.mxu0 %v396
      %844 = vmatprep.subr.bf16.mxu0 0
      %845 = vmatpush1.bf16.msra.mxu0 %v402
      %846 = vmatprep.mubr.bf16.mxu0 %v674
      %847 = vmatmul.mubr.bf16.gmra.mrb[0].mxu0 %v666
      %v848 = vpop.f32.mrb[0].mxu0
      %v849 = vadd.f32 %v655, %v848
      %v850 = vpop.f32.mrb[0].mxu0
      %v851 = vpop.f32.mrb[0].mxu0
      %v852 = vpop.f32.mrb[0].mxu0
      %853 = vdwg.mxu0
      %854 = vmatprep.subr.bf16.mxu0 0
      %855 = vmatpush1.bf16.msra.mxu0 %v429
      %856 = vmatprep.subr.bf16.mxu0 0
      %857 = vmatpush1.bf16.msra.mxu0 %v435
      %858 = vmatprep.subr.bf16.mxu0 0
      %859 = vmatpush1.bf16.msra.mxu0 %v441
      %860 = vmatprep.subr.bf16.mxu0 0
      %861 = vmatpush1.bf16.msra.mxu0 %v447
      %862 = vmatprep.subr.bf16.mxu0 0
      %863 = vmatpush1.bf16.msra.mxu0 %v474
      %864 = vmatprep.subr.bf16.mxu0 0
      %865 = vmatpush1.bf16.msra.mxu0 %v480
      %866 = vmatprep.subr.bf16.mxu0 0
      %867 = vmatpush1.bf16.msra.mxu0 %v486
      %868 = vmatprep.subr.bf16.mxu0 0
      %869 = vmatpush1.bf16.msra.mxu0 %v492
      %870 = vmatprep.subr.bf16.mxu0 0
      %871 = vmatpush1.bf16.msra.mxu0 %v519
      %872 = vmatprep.subr.bf16.mxu0 0
      %873 = vmatpush1.bf16.msra.mxu0 %v525
      %874 = vmatprep.subr.bf16.mxu0 0
      %875 = vmatpush1.bf16.msra.mxu0 %v531
      %876 = vmatprep.subr.bf16.mxu0 0
      %877 = vmatpush1.bf16.msra.mxu0 %v537
      %878 = vmatprep.subr.bf16.mxu0 0
      %879 = vmatpush1.bf16.msra.mxu0 %v564
      %880 = vmatprep.subr.bf16.mxu0 0
      %881 = vmatpush1.bf16.msra.mxu0 %v570
      %882 = vmatprep.subr.bf16.mxu0 0
      %883 = vmatpush1.bf16.msra.mxu0 %v576
      %884 = vmatprep.subr.bf16.mxu0 0
      %885 = vmatpush1.bf16.msra.mxu0 %v582
      %886 = vmatprep.mubr.bf16.mxu0 %v675
      %887 = vmatmul.mubr.bf16.gmra.mrb[0].mxu0 %v673
      %v888 = vpop.f32.mrb[0].mxu0
      %v889 = vadd.f32 %v849, %v888
      %v890 = vpop.f32.mrb[0].mxu0
      %v891 = vpop.f32.mrb[0].mxu0
      %v892 = vpop.f32.mrb[0].mxu0
      %893 = vdwg.mxu0
      %894 = vmatprep.subr.bf16.mxu0 0
      %895 = vmatpush1.bf16.msra.mxu0 %v609
      %896 = vmatprep.subr.bf16.mxu0 0
      %897 = vmatpush1.bf16.msra.mxu0 %v615
      %898 = vmatprep.subr.bf16.mxu0 0
      %899 = vmatpush1.bf16.msra.mxu0 %v621
      %900 = vmatprep.subr.bf16.mxu0 0
      %901 = vmatpush1.bf16.msra.mxu0 %v627
      %902 = vmatprep.subr.bf16.mxu0 0
      %903 = vmatpush1.bf16.msra.mxu0 0
      %904 = vmatprep.subr.bf16.mxu0 0
      %905 = vmatpush1.bf16.msra.mxu0 0
      %906 = vmatprep.subr.bf16.mxu0 0
      %907 = vmatpush1.bf16.msra.mxu0 0
      %908 = vmatprep.subr.bf16.mxu0 0
      %909 = vmatpush1.bf16.msra.mxu0 0
      %910 = vmatprep.subr.bf16.mxu0 0
      %911 = vmatpush1.bf16.msra.mxu0 0
      %912 = vmatprep.subr.bf16.mxu0 0
      %913 = vmatpush1.bf16.msra.mxu0 0
      %914 = vmatprep.subr.bf16.mxu0 0
      %915 = vmatpush1.bf16.msra.mxu0 0
      %916 = vmatprep.subr.bf16.mxu0 0
      %917 = vmatpush1.bf16.msra.mxu0 0
      %918 = vmatprep.subr.bf16.mxu0 0
      %919 = vmatpush1.bf16.msra.mxu0 0
      %920 = vmatprep.subr.bf16.mxu0 0
      %921 = vmatpush1.bf16.msra.mxu0 0
      %922 = vmatprep.subr.bf16.mxu0 0
      %923 = vmatpush1.bf16.msra.mxu0 0
      %924 = vmatprep.subr.bf16.mxu0 0
      %925 = vmatpush1.bf16.msra.mxu0 0
      %926 = vmatprep.mubr.bf16.mxu0 0
      %927 = vmatmul.mubr.bf16.gmra.mrb[0].mxu0 %v689
      %v928 = vpop.f32.mrb[0].mxu0
      %v929 = vadd.f32 %v889, %v928
      %v930 = vpop.f32.mrb[0].mxu0
      %v931 = vpop.f32.mrb[0].mxu0
      %v932 = vpop.f32.mrb[0].mxu0
      %933 = vdwg.mxu0
      %v936 = vcombine.low %v808, %v810
      %938 = vst [vmem:[%s206] sm:$0x77] %v936
      %vm939 = vcmask 256000
      %940 = vst.msk [vmem:[%s206 + $0x8] sm:$0x7] %vm939, %v929
      %s941 = smul.u32 3, %s19
      %p942 = scmp.lt.s32.totalorder %s18, 1
      %s943 = scalar_select %p942, %s18, 1
      %p944 = scmp.lt.s32.totalorder %s941, 2
      %s945 = scalar_select %p944, %s941, 2
      %s946 = smul.addr %s943, 3
      %s947 = sadd.s32 %s945, %s946
      %s948 = smul.addr %s947, 4
      %s949 = scalar_lea.vmem %s3, %s948
      // Predicated region
      $region33: #{output_proj.1} parent=31 // pred_check
        %p950 = pneg %p116
      $region34: #{output_proj.1} parent=31 // pred_check_branch
        %952 = sbr.rel (%p950) target = $region36
      $region35: #{output_proj.1} parent=31 // pred_region
        %s953 = smul.u32 3, %s19
      $region36: #{output_proj.1} parent=31 // pred_fallthru
        _
    $region32: #{output_proj.1} parent=5 // pred_fallthru
      _
    %p954 = scmp.le.s32.totalorder 2, %s9
    // Predicated region
    $region37: #{output_proj.1} parent=5 // pred_check
      %p955 = pneg %p954
    $region38: #{output_proj.1} parent=5 // pred_check_branch
      %957 = sbr.rel (%p955) target = $region40
    $region39: #{output_proj.1} parent=5 // pred_region
      %s958 = ssub.s32 %s9, 2
      // Predicated region
      $region41: #{output_proj.1} parent=39 // pred_check
        %p959 = pneg %p122
      $region42: #{output_proj.1} parent=39 // pred_check_branch
        %961 = sbr.rel (%p959) target = $region44
      $region43: #{output_proj.1} parent=39 // pred_region
        %s962 = smul.u32 3, %s21
        %p963 = scmp.lt.s32.totalorder %s20, 1
        %s964 = scalar_select %p963, %s20, 1
        %p965 = scmp.lt.s32.totalorder %s962, 2
        %s966 = scalar_select %p965, %s962, 2
        %s967 = smul.addr %s964, 3
        %s968 = sadd.s32 %s966, %s967
        %s969 = smul.addr %s968, 4
        %s970 = scalar_lea.vmem %s3, %s969
      $region44: #{output_proj.1} parent=39 // pred_fallthru
        _
    $region40: #{output_proj.1} parent=5 // pred_fallthru
      _
  $region6: #{output_proj.1} parent=0 // loop_footer
    %s13 = sadd.s32 1, %s9
  $region7: #{output_proj.1} parent=0 // loop_footer_branch
    %8 = sbr.rel target = $region3
  $region8: #{output_proj.1} parent=0 // loop_exit
    _

</llo_original>
